<compile_context>
chip_gen: v7x
topology: tpu7x:2x2x1
jax: 0.10.0
libtpu: 0.0.40
codegen_flags: <defaults>
</compile_context>

<pallas_src>
import jax
import jax.numpy as jnp
from jax.experimental import pallas as pl
from jax.experimental.pallas import tpu as pltpu


def classblock_kernel(x_ref, w_ref, b_ref, o_ref):
    # LeakyReLU(negative_slope=0.1): one vmul + vmax, in f32 on the VPU.
    x = x_ref[...].astype(jnp.float32)
    x = jnp.maximum(x, 0.1 * x)
    # Dropout (eval mode) == identity.
    # Linear: (TM, D) bf16 @ (D, C) bf16 -> f32 accumulation on the MXU.
    acc = jnp.dot(x.astype(jnp.bfloat16), w_ref[...],
                  preferred_element_type=jnp.float32)
    o_ref[...] = (acc + b_ref[...]).astype(o_ref.dtype)


def prepare_classblock_params(w, b):
    """Once-per-model preprocessing (hoisted out of the per-call path).

    w: (C, D) PyTorch Linear weight (out_features, in_features)
    b: (C,)   Linear bias
    returns (w_t, b2d): (D, C) bf16 weight, (1, C) f32 bias.
    """
    w_t = jnp.asarray(w).T.astype(jnp.bfloat16)              # (D, C)
    b2d = jnp.asarray(b).reshape(1, -1).astype(jnp.float32)  # (1, C)
    return w_t, b2d


def class_block_forward(x, w_t, b2d, *, tm_max=1024, min_grid_steps=1,
                        out_dtype=jnp.float32):
    """ClassBlock forward (eval mode).

    x:   (B, D) activations (f32; bf16 also accepted, halves the input stream)
    w_t: (D, C) bf16 weight from prepare_classblock_params
    b2d: (1, C) f32 bias from prepare_classblock_params
    returns (B, C) out_dtype
    """
    B, D = x.shape
    Dw, C = w_t.shape
    assert D == Dw, (D, Dw)
    assert b2d.shape == (1, C), b2d.shape

    # Row tile: multiple of 8 sublanes, as large as possible (cap tm_max) so
    # per-grid-step overhead is amortized.  min_grid_steps >= 2 keeps both v7x
    # TensorCores busy on large batches; 1 (fewest steps) is best on 1-TC chips.
    rounded_b = ((B + 7) // 8) * 8
    tm = min(tm_max, rounded_b)
    if min_grid_steps > 1:
        tm = min(tm, max(8, ((pl.cdiv(rounded_b, min_grid_steps) + 7) // 8) * 8))
    grid_rows = pl.cdiv(B, tm)

    # VMEM budget: resident weight/bias + double-buffered x and out tiles.
    x_bytes = tm * D * jnp.dtype(x.dtype).itemsize
    out_bytes = tm * C * jnp.dtype(out_dtype).itemsize
    w_bytes = D * C * 2 + C * 4
    vmem_needed = 2 * (x_bytes + out_bytes) + w_bytes
    vmem_limit = int(min(max(2 * vmem_needed, 16 * 1024 * 1024),
                         48 * 1024 * 1024))

    return pl.pallas_call(
        classblock_kernel,
        out_shape=jax.ShapeDtypeStruct((B, C), out_dtype),
        grid_spec=pltpu.PrefetchScalarGridSpec(
            num_scalar_prefetch=0,
            grid=(grid_rows,),
            in_specs=[
                pl.BlockSpec((tm, D), lambda i: (i, 0)),   # streamed x tiles
                pl.BlockSpec((Dw, C), lambda i: (0, 0)),   # weight resident
                pl.BlockSpec((1, C), lambda i: (0, 0)),    # bias resident
            ],
            out_specs=pl.BlockSpec((tm, C), lambda i: (i, 0)),
        ),
        compiler_params=pltpu.CompilerParams(
            # Independent row tiles -> parallel (shards across v7x's 2 TCs).
            dimension_semantics=("parallel",),
            vmem_limit_bytes=vmem_limit,
        ),
    )(x, w_t, b2d)


def reference_forward_bf16(x, w, b):
    """Reference matching the kernel's bf16-operand / f32-accumulate math."""
    xa = jnp.maximum(x, 0.1 * x)
    xa = xa.astype(jnp.bfloat16).astype(jnp.float32)
    wt = w.T.astype(jnp.bfloat16).astype(jnp.float32)
    return xa @ wt + b[None, :]


def reference_forward_f32(x, w, b):
    xa = jnp.maximum(x, 0.1 * x)
    return xa @ w.T + b[None, :]


if __name__ == "__main__":
    key = jax.random.PRNGKey(0)
    k_x, k_w, k_x2 = jax.random.split(key, 3)

    # Shapes implied by the module: input_dim=32, class_num=16.
    B, D, C = 256, 32, 16

    x = jax.random.normal(k_x, (B, D), dtype=jnp.float32)

    # Deterministic parameter init mirroring weights_init_classifier:
    #   Linear.weight ~ Normal(0, 0.001), bias = 0.
    w = 0.001 * jax.random.normal(k_w, (C, D), dtype=jnp.float32)  # (out, in)
    b = jnp.zeros((C,), dtype=jnp.float32)

    # Hoisted once-per-model parameter prep.
    w_t, b2d = prepare_classblock_params(w, b)

    # Main path: single grid step for the small batch.
    out = class_block_forward(x, w_t, b2d)
    out = jax.block_until_ready(out)

    ref_bf16 = reference_forward_bf16(x, w, b)
    ref_f32 = reference_forward_f32(x, w, b)

    assert out.shape == (B, C)
    # Tight check against the bf16-rounded reference (same math as kernel).
    assert jnp.allclose(out, ref_bf16, atol=1e-5, rtol=1e-4), (
        float(jnp.max(jnp.abs(out - ref_bf16))))
    # Sanity check against the pure-f32 reference (bf16 rounding tolerance).
    assert jnp.allclose(out, ref_f32, atol=1e-3, rtol=2e-2), (
        float(jnp.max(jnp.abs(out - ref_f32))))

    # Secondary check: ragged batch (B not a multiple of the tile) exercises the
    # no-padding multi-step grid with a partial last block.
    B2 = 77
    x2 = jax.random.normal(k_x2, (B2, D), dtype=jnp.float32)
    out2 = class_block_forward(x2, w_t, b2d, tm_max=32)
    out2 = jax.block_until_ready(out2)
    ref2 = reference_forward_bf16(x2, w, b)
    assert out2.shape == (B2, C)
    assert jnp.allclose(out2, ref2, atol=1e-5, rtol=1e-4), (
        float(jnp.max(jnp.abs(out2 - ref2))))

    print("KERNEL_OK")
</pallas_src>

<mosaic_0001>
module attributes {stable_mosaic.version = 11 : i64} {
  func.func @classblock_kernel(%arg0: i32, %arg1: memref<256x32xf32, #tpu.memory_space<vmem>>, %arg2: memref<32x16xbf16, #tpu.memory_space<vmem>>, %arg3: memref<1x16xf32, #tpu.memory_space<vmem>>, %arg4: memref<256x16xf32, #tpu.memory_space<vmem>>) attributes {dimension_semantics = [#tpu.dimension_semantics<parallel>], iteration_bounds = array<i64: 1>, scalar_prefetch = 0 : i64, scratch_operands = 0 : i64, tpu.core_type = #tpu.core_type<tc>, window_params = [{transform_indices = @transform_0, window_bounds = array<i64: 256, 32>}, {pipeline_mode = #tpu.pipeline_mode<synchronous>, transform_indices = @transform_1, window_bounds = array<i64: 32, 16>}, {pipeline_mode = #tpu.pipeline_mode<synchronous>, transform_indices = @transform_2, window_bounds = array<i64: 1, 16>}, {transform_indices = @transform_3, window_bounds = array<i64: 256, 16>}]} {
    %c0 = arith.constant 0 : index
    %c0_0 = arith.constant 0 : index
    %0 = vector.load %arg1[%c0, %c0_0] : memref<256x32xf32, #tpu.memory_space<vmem>>, vector<256x32xf32>
    %cst = arith.constant 1.000000e-01 : f32
    %1 = vector.broadcast %cst : f32 to vector<256x32xf32>
    %2 = arith.mulf %1, %0 : vector<256x32xf32>
    %3 = arith.maximumf %0, %2 : vector<256x32xf32>
    %4 = arith.truncf %3 : vector<256x32xf32> to vector<256x32xbf16>
    %c0_1 = arith.constant 0 : index
    %c0_2 = arith.constant 0 : index
    %5 = vector.load %arg2[%c0_1, %c0_2] : memref<32x16xbf16, #tpu.memory_space<vmem>>, vector<32x16xbf16>
    %cst_3 = arith.constant dense<0.000000e+00> : vector<256x16xf32>
    %6 = tpu.matmul %4, %5, %cst_3 {dimension_numbers = #tpu.dot_dimension_numbers<[1], [0], [0], [1], [0, 0, 1, 1], [], []>} : vector<256x32xbf16>, vector<32x16xbf16>, vector<256x16xf32> -> vector<256x16xf32>
    %c0_4 = arith.constant 0 : index
    %c0_5 = arith.constant 0 : index
    %7 = vector.load %arg3[%c0_4, %c0_5] : memref<1x16xf32, #tpu.memory_space<vmem>>, vector<1x16xf32>
    %8 = vector.broadcast %7 : vector<1x16xf32> to vector<256x16xf32>
    %9 = arith.addf %6, %8 : vector<256x16xf32>
    %c0_6 = arith.constant 0 : index
    %c0_7 = arith.constant 0 : index
    %10 = vector.load %arg4[%c0_6, %c0_7] : memref<256x16xf32, #tpu.memory_space<vmem>>, vector<256x16xf32>
    tpu.vector_store %arg4[%c0_6, %c0_7], %9 {strides = array<i32>} : memref<256x16xf32, #tpu.memory_space<vmem>>, vector<256x16xf32>,
    return
  }
  func.func @transform_0(%arg0: i32) -> (i32, i32) {
    %c0_i32 = arith.constant 0 : i32
    %c0_i32_0 = arith.constant 0 : i32
    return %arg0, %c0_i32 : i32, i32
  }
  func.func @transform_1(%arg0: i32) -> (i32, i32) {
    %c0_i32 = arith.constant 0 : i32
    %c0_i32_0 = arith.constant 0 : i32
    %c0_i32_1 = arith.constant 0 : i32
    return %c0_i32, %c0_i32_0 : i32, i32
  }
  func.func @transform_2(%arg0: i32) -> (i32, i32) {
    %c0_i32 = arith.constant 0 : i32
    %c0_i32_0 = arith.constant 0 : i32
    %c0_i32_1 = arith.constant 0 : i32
    return %c0_i32, %c0_i32_0 : i32, i32
  }
  func.func @transform_3(%arg0: i32) -> (i32, i32) {
    %c0_i32 = arith.constant 0 : i32
    %c0_i32_0 = arith.constant 0 : i32
    return %arg0, %c0_i32 : i32, i32
  }
}

</mosaic_0001>

<llo_original>
// kernel: tpu_custom_call.1
$region0: #{tpu_custom_call.1}
  #allocation0 [shape = 'u32[]', space=smem, size = 0x4, offset = 0x4, fixed_abs, tag = 'smem constant byte address 0x4 - core index']
  #allocation1 [shape = 'u32[144,128]{1,0:T(1,128)}', space=vmem, size = 0x12000, scoped, tag = 'internal scratch']
  %s0 = inlined_call_operand.vmem [shape: f32[256,32], index: 0, kind: input, shape index: {}]
  %s1 = inlined_call_operand.vmem [shape: bf16[32,16], index: 1, kind: input, shape index: {}]
  %s2 = inlined_call_operand.vmem [shape: f32[1,16], index: 2, kind: input, shape index: {}]
  %s3 = inlined_call_operand.vmem [shape: f32[256,16], index: 3, kind: output, shape index: {}]
  %s4 = sld [smem:[#allocation0]]
  $region22: #{tpu_custom_call.1} parent=0
    _
  %s6 = ssub.s32 1, %s4
  %s7 = scalar_select 0, %s6, %s4
  // Predicated region
  $region2: #{tpu_custom_call.1} parent=0 // pred_check
    _
  $region3: #{tpu_custom_call.1} parent=0 // pred_check_branch
    %9 = sbr.rel (0) target = $region5
  $region4: #{tpu_custom_call.1} parent=0 // pred_region
    _
  $region5: #{tpu_custom_call.1} parent=0 // pred_fallthru
    _
  // Predicated region
  $region6: #{tpu_custom_call.1} parent=0 // pred_check
    _
  $region7: #{tpu_custom_call.1} parent=0 // pred_check_branch
    %11 = sbr.rel (0) target = $region9
  $region8: #{tpu_custom_call.1} parent=0 // pred_region
    _
  $region9: #{tpu_custom_call.1} parent=0 // pred_fallthru
    _
  // Predicated region
  $region10: #{tpu_custom_call.1} parent=0 // pred_check
    _
  $region11: #{tpu_custom_call.1} parent=0 // pred_check_branch
    %13 = sbr.rel (0) target = $region13
  $region12: #{tpu_custom_call.1} parent=0 // pred_region
    _
  $region13: #{tpu_custom_call.1} parent=0 // pred_fallthru
    _
  %v15 = vld [vmem:[%s0] sm:$0xff]
  %v16 = vld [vmem:[%s0 + $0x8] sm:$0xff]
  %v17 = vld [vmem:[%s0 + $0x10] sm:$0xff]
  %v18 = vld [vmem:[%s0 + $0x18] sm:$0xff]
  %v19 = vld [vmem:[%s0 + $0x20] sm:$0xff]
  %v20 = vld [vmem:[%s0 + $0x28] sm:$0xff]
  %v21 = vld [vmem:[%s0 + $0x30] sm:$0xff]
  %v22 = vld [vmem:[%s0 + $0x38] sm:$0xff]
  %v23 = vld [vmem:[%s0 + $0x40] sm:$0xff]
  %v24 = vld [vmem:[%s0 + $0x48] sm:$0xff]
  %v25 = vld [vmem:[%s0 + $0x50] sm:$0xff]
  %v26 = vld [vmem:[%s0 + $0x58] sm:$0xff]
  %v27 = vld [vmem:[%s0 + $0x60] sm:$0xff]
  %v28 = vld [vmem:[%s0 + $0x68] sm:$0xff]
  %v29 = vld [vmem:[%s0 + $0x70] sm:$0xff]
  %v30 = vld [vmem:[%s0 + $0x78] sm:$0xff]
  %v31 = vld [vmem:[%s0 + $0x80] sm:$0xff]
  %v32 = vld [vmem:[%s0 + $0x88] sm:$0xff]
  %v33 = vld [vmem:[%s0 + $0x90] sm:$0xff]
  %v34 = vld [vmem:[%s0 + $0x98] sm:$0xff]
  %v35 = vld [vmem:[%s0 + $0xa0] sm:$0xff]
  %v36 = vld [vmem:[%s0 + $0xa8] sm:$0xff]
  %v37 = vld [vmem:[%s0 + $0xb0] sm:$0xff]
  %v38 = vld [vmem:[%s0 + $0xb8] sm:$0xff]
  %v39 = vld [vmem:[%s0 + $0xc0] sm:$0xff]
  %v40 = vld [vmem:[%s0 + $0xc8] sm:$0xff]
  %v41 = vld [vmem:[%s0 + $0xd0] sm:$0xff]
  %v42 = vld [vmem:[%s0 + $0xd8] sm:$0xff]
  %v43 = vld [vmem:[%s0 + $0xe0] sm:$0xff]
  %v44 = vld [vmem:[%s0 + $0xe8] sm:$0xff]
  %v45 = vld [vmem:[%s0 + $0xf0] sm:$0xff]
  %v46 = vld [vmem:[%s0 + $0xf8] sm:$0xff]
  %v47 = vmul.f32 %v15, 0.1
  %v48 = vmul.f32 %v16, 0.1
  %v49 = vmul.f32 %v17, 0.1
  %v50 = vmul.f32 %v18, 0.1
  %v51 = vmul.f32 %v19, 0.1
  %v52 = vmul.f32 %v20, 0.1
  %v53 = vmul.f32 %v21, 0.1
  %v54 = vmul.f32 %v22, 0.1
  %v55 = vmul.f32 %v23, 0.1
  %v56 = vmul.f32 %v24, 0.1
  %v57 = vmul.f32 %v25, 0.1
  %v58 = vmul.f32 %v26, 0.1
  %v59 = vmul.f32 %v27, 0.1
  %v60 = vmul.f32 %v28, 0.1
  %v61 = vmul.f32 %v29, 0.1
  %v62 = vmul.f32 %v30, 0.1
  %v63 = vmul.f32 %v31, 0.1
  %v64 = vmul.f32 %v32, 0.1
  %v65 = vmul.f32 %v33, 0.1
  %v66 = vmul.f32 %v34, 0.1
  %v67 = vmul.f32 %v35, 0.1
  %v68 = vmul.f32 %v36, 0.1
  %v69 = vmul.f32 %v37, 0.1
  %v70 = vmul.f32 %v38, 0.1
  %v71 = vmul.f32 %v39, 0.1
  %v72 = vmul.f32 %v40, 0.1
  %v73 = vmul.f32 %v41, 0.1
  %v74 = vmul.f32 %v42, 0.1
  %v75 = vmul.f32 %v43, 0.1
  %v76 = vmul.f32 %v44, 0.1
  %v77 = vmul.f32 %v45, 0.1
  %v78 = vmul.f32 %v46, 0.1
  %v79 = vmax.f32 %v15, %v47
  %v80 = vmax.f32 %v16, %v48
  %v81 = vmax.f32 %v17, %v49
  %v82 = vmax.f32 %v18, %v50
  %v83 = vmax.f32 %v19, %v51
  %v84 = vmax.f32 %v20, %v52
  %v85 = vmax.f32 %v21, %v53
  %v86 = vmax.f32 %v22, %v54
  %v87 = vmax.f32 %v23, %v55
  %v88 = vmax.f32 %v24, %v56
  %v89 = vmax.f32 %v25, %v57
  %v90 = vmax.f32 %v26, %v58
  %v91 = vmax.f32 %v27, %v59
  %v92 = vmax.f32 %v28, %v60
  %v93 = vmax.f32 %v29, %v61
  %v94 = vmax.f32 %v30, %v62
  %v95 = vmax.f32 %v31, %v63
  %v96 = vmax.f32 %v32, %v64
  %v97 = vmax.f32 %v33, %v65
  %v98 = vmax.f32 %v34, %v66
  %v99 = vmax.f32 %v35, %v67
  %v100 = vmax.f32 %v36, %v68
  %v101 = vmax.f32 %v37, %v69
  %v102 = vmax.f32 %v38, %v70
  %v103 = vmax.f32 %v39, %v71
  %v104 = vmax.f32 %v40, %v72
  %v105 = vmax.f32 %v41, %v73
  %v106 = vmax.f32 %v42, %v74
  %v107 = vmax.f32 %v43, %v75
  %v108 = vmax.f32 %v44, %v76
  %v109 = vmax.f32 %v45, %v77
  %v110 = vmax.f32 %v46, %v78
  %v111 = vpack.c.bf16 %v80, %v79
  %v112 = vpack.c.bf16 %v82, %v81
  %v113 = vpack.c.bf16 %v84, %v83
  %v114 = vpack.c.bf16 %v86, %v85
  %v115 = vpack.c.bf16 %v88, %v87
  %v116 = vpack.c.bf16 %v90, %v89
  %v117 = vpack.c.bf16 %v92, %v91
  %v118 = vpack.c.bf16 %v94, %v93
  %v119 = vpack.c.bf16 %v96, %v95
  %v120 = vpack.c.bf16 %v98, %v97
  %v121 = vpack.c.bf16 %v100, %v99
  %v122 = vpack.c.bf16 %v102, %v101
  %v123 = vpack.c.bf16 %v104, %v103
  %v124 = vpack.c.bf16 %v106, %v105
  %v125 = vpack.c.bf16 %v108, %v107
  %v126 = vpack.c.bf16 %v110, %v109
  %v127 = vld [vmem:[%s1] sm:$0xf]
  %v128 = vld [vmem:[%s1 + $0x4] sm:$0xf]
  %v129 = vld [vmem:[%s1 + $0x8] sm:$0xf]
  %v130 = vld [vmem:[%s1 + $0xc] sm:$0xf]
  %v131 = vld [vmem:[%s2] sm:$0x1]
  %v133 = vlaneseq
  %v134 = vshrl.u32 %v133, 7
  %v135 = vsub.s32 0, %v134
  %v136 = vrot.slane %v131, %v135
  %v142 = vunpack.c.l.b16 %v127
  %v143 = vunpack.c.l.b16 %v128
  %v144 = vunpack.c.l.b16 %v129
  %v145 = vunpack.c.l.b16 %v130
  %v146 = vpack.c.b16 %v143, %v142
  %v147 = vpack.c.b16 %v145, %v144
  %vm150 = vcmask 261120
  %v152 = vsel %vm150, %v111, 0
  %v155 = vsel %vm150, %v112, 0
  %v158 = vsel %vm150, %v113, 0
  %v161 = vsel %vm150, %v114, 0
  %v164 = vsel %vm150, %v115, 0
  %v167 = vsel %vm150, %v116, 0
  %v170 = vsel %vm150, %v117, 0
  %v173 = vsel %vm150, %v118, 0
  %v176 = vsel %vm150, %v119, 0
  %v179 = vsel %vm150, %v120, 0
  %v182 = vsel %vm150, %v121, 0
  %v185 = vsel %vm150, %v122, 0
  %v188 = vsel %vm150, %v123, 0
  %v191 = vsel %vm150, %v124, 0
  %v194 = vsel %vm150, %v125, 0
  %v197 = vsel %vm150, %v126, 0
  %199 = vmatprep.subr.bf16.mxu0 0
  %200 = vmatpush1.bf16.msra.mxu0 %v146
  %201 = vmatprep.subr.bf16.mxu0 0
  %202 = vmatpush1.bf16.msra.mxu0 %v147
  %203 = vmatprep.subr.bf16.mxu0 0
  %204 = vmatpush1.bf16.msra.mxu0 0
  %205 = vmatprep.subr.bf16.mxu0 0
  %206 = vmatpush1.bf16.msra.mxu0 0
  %207 = vmatprep.subr.bf16.mxu0 0
  %208 = vmatpush1.bf16.msra.mxu0 0
  %209 = vmatprep.subr.bf16.mxu0 0
  %210 = vmatpush1.bf16.msra.mxu0 0
  %211 = vmatprep.subr.bf16.mxu0 0
  %212 = vmatpush1.bf16.msra.mxu0 0
  %213 = vmatprep.subr.bf16.mxu0 0
  %214 = vmatpush1.bf16.msra.mxu0 0
  %215 = vmatprep.subr.bf16.mxu0 0
  %216 = vmatpush1.bf16.msra.mxu0 0
  %217 = vmatprep.subr.bf16.mxu0 0
  %218 = vmatpush1.bf16.msra.mxu0 0
  %219 = vmatprep.subr.bf16.mxu0 0
  %220 = vmatpush1.bf16.msra.mxu0 0
  %221 = vmatprep.subr.bf16.mxu0 0
  %222 = vmatpush1.bf16.msra.mxu0 0
  %223 = vmatprep.subr.bf16.mxu0 0
  %224 = vmatpush1.bf16.msra.mxu0 0
  %225 = vmatprep.subr.bf16.mxu0 0
  %226 = vmatpush1.bf16.msra.mxu0 0
  %227 = vmatprep.subr.bf16.mxu0 0
  %228 = vmatpush1.bf16.msra.mxu0 0
  %229 = vmatprep.subr.bf16.mxu0 0
  %230 = vmatpush1.bf16.msra.mxu0 0
  %231 = vmatprep.mubr.bf16.mxu0 0
  %232 = vmatmul.mubr.bf16.gmra.mrb[0].mxu0 %v152
  %v233 = vpop.f32.mrb[0].mxu0
  %v234 = vadd.f32 %v136, %v233
  %v235 = vpop.f32.mrb[0].mxu0
  %v236 = vpop.f32.mrb[0].mxu0
  %v237 = vadd.f32 %v136, %v236
  %v238 = vpop.f32.mrb[0].mxu0
  %239 = vmatprep.mubr.bf16.mxu0 0
  %240 = vmatmul.mubr.bf16.gmra.mrb[0].mxu0 %v155
  %v241 = vpop.f32.mrb[0].mxu0
  %v242 = vadd.f32 %v136, %v241
  %v243 = vpop.f32.mrb[0].mxu0
  %v244 = vpop.f32.mrb[0].mxu0
  %v245 = vadd.f32 %v136, %v244
  %v246 = vpop.f32.mrb[0].mxu0
  %247 = vmatprep.mubr.bf16.mxu0 0
  %248 = vmatmul.mubr.bf16.gmra.mrb[0].mxu0 %v158
  %v249 = vpop.f32.mrb[0].mxu0
  %v250 = vadd.f32 %v136, %v249
  %v251 = vpop.f32.mrb[0].mxu0
  %v252 = vpop.f32.mrb[0].mxu0
  %v253 = vadd.f32 %v136, %v252
  %v254 = vpop.f32.mrb[0].mxu0
  %255 = vmatprep.mubr.bf16.mxu0 0
  %256 = vmatmul.mubr.bf16.gmra.mrb[0].mxu0 %v161
  %v257 = vpop.f32.mrb[0].mxu0
  %v258 = vadd.f32 %v136, %v257
  %v259 = vpop.f32.mrb[0].mxu0
  %v260 = vpop.f32.mrb[0].mxu0
  %v261 = vadd.f32 %v136, %v260
  %v262 = vpop.f32.mrb[0].mxu0
  %263 = vmatprep.mubr.bf16.mxu0 0
  %264 = vmatmul.mubr.bf16.gmra.mrb[0].mxu0 %v164
  %v265 = vpop.f32.mrb[0].mxu0
  %v266 = vadd.f32 %v136, %v265
  %v267 = vpop.f32.mrb[0].mxu0
  %v268 = vpop.f32.mrb[0].mxu0
  %v269 = vadd.f32 %v136, %v268
  %v270 = vpop.f32.mrb[0].mxu0
  %271 = vmatprep.mubr.bf16.mxu0 0
  %272 = vmatmul.mubr.bf16.gmra.mrb[0].mxu0 %v167
  %v273 = vpop.f32.mrb[0].mxu0
  %v274 = vadd.f32 %v136, %v273
  %v275 = vpop.f32.mrb[0].mxu0
  %v276 = vpop.f32.mrb[0].mxu0
  %v277 = vadd.f32 %v136, %v276
  %v278 = vpop.f32.mrb[0].mxu0
  %279 = vmatprep.mubr.bf16.mxu0 0
  %280 = vmatmul.mubr.bf16.gmra.mrb[0].mxu0 %v170
  %v281 = vpop.f32.mrb[0].mxu0
  %v282 = vadd.f32 %v136, %v281
  %v283 = vpop.f32.mrb[0].mxu0
  %v284 = vpop.f32.mrb[0].mxu0
  %v285 = vadd.f32 %v136, %v284
  %v286 = vpop.f32.mrb[0].mxu0
  %287 = vmatprep.mubr.bf16.mxu0 0
  %288 = vmatmul.mubr.bf16.gmra.mrb[0].mxu0 %v173
  %v289 = vpop.f32.mrb[0].mxu0
  %v290 = vadd.f32 %v136, %v289
  %v291 = vpop.f32.mrb[0].mxu0
  %v292 = vpop.f32.mrb[0].mxu0
  %v293 = vadd.f32 %v136, %v292
  %v294 = vpop.f32.mrb[0].mxu0
  %295 = vmatprep.mubr.bf16.mxu0 0
  %296 = vmatmul.mubr.bf16.gmra.mrb[0].mxu0 %v176
  %v297 = vpop.f32.mrb[0].mxu0
  %v298 = vadd.f32 %v136, %v297
  %v299 = vpop.f32.mrb[0].mxu0
  %v300 = vpop.f32.mrb[0].mxu0
  %v301 = vadd.f32 %v136, %v300
  %v302 = vpop.f32.mrb[0].mxu0
  %303 = vmatprep.mubr.bf16.mxu0 0
  %304 = vmatmul.mubr.bf16.gmra.mrb[0].mxu0 %v179
  %v305 = vpop.f32.mrb[0].mxu0
  %v306 = vadd.f32 %v136, %v305
  %v307 = vpop.f32.mrb[0].mxu0
  %v308 = vpop.f32.mrb[0].mxu0
  %v309 = vadd.f32 %v136, %v308
  %v310 = vpop.f32.mrb[0].mxu0
  %311 = vmatprep.mubr.bf16.mxu0 0
  %312 = vmatmul.mubr.bf16.gmra.mrb[0].mxu0 %v182
  %v313 = vpop.f32.mrb[0].mxu0
  %v314 = vadd.f32 %v136, %v313
  %v315 = vpop.f32.mrb[0].mxu0
  %v316 = vpop.f32.mrb[0].mxu0
  %v317 = vadd.f32 %v136, %v316
  %v318 = vpop.f32.mrb[0].mxu0
  %319 = vmatprep.mubr.bf16.mxu0 0
  %320 = vmatmul.mubr.bf16.gmra.mrb[0].mxu0 %v185
  %v321 = vpop.f32.mrb[0].mxu0
  %v322 = vadd.f32 %v136, %v321
  %v323 = vpop.f32.mrb[0].mxu0
  %v324 = vpop.f32.mrb[0].mxu0
  %v325 = vadd.f32 %v136, %v324
  %v326 = vpop.f32.mrb[0].mxu0
  %327 = vmatprep.mubr.bf16.mxu0 0
  %328 = vmatmul.mubr.bf16.gmra.mrb[0].mxu0 %v188
  %v329 = vpop.f32.mrb[0].mxu0
  %v330 = vadd.f32 %v136, %v329
  %v331 = vpop.f32.mrb[0].mxu0
  %v332 = vpop.f32.mrb[0].mxu0
  %v333 = vadd.f32 %v136, %v332
  %v334 = vpop.f32.mrb[0].mxu0
  %335 = vmatprep.mubr.bf16.mxu0 0
  %336 = vmatmul.mubr.bf16.gmra.mrb[0].mxu0 %v191
  %v337 = vpop.f32.mrb[0].mxu0
  %v338 = vadd.f32 %v136, %v337
  %v339 = vpop.f32.mrb[0].mxu0
  %v340 = vpop.f32.mrb[0].mxu0
  %v341 = vadd.f32 %v136, %v340
  %v342 = vpop.f32.mrb[0].mxu0
  %343 = vmatprep.mubr.bf16.mxu0 0
  %344 = vmatmul.mubr.bf16.gmra.mrb[0].mxu0 %v194
  %v345 = vpop.f32.mrb[0].mxu0
  %v346 = vadd.f32 %v136, %v345
  %v347 = vpop.f32.mrb[0].mxu0
  %v348 = vpop.f32.mrb[0].mxu0
  %v349 = vadd.f32 %v136, %v348
  %v350 = vpop.f32.mrb[0].mxu0
  %351 = vmatprep.mubr.bf16.mxu0 0
  %352 = vmatmul.mubr.bf16.gmra.mrb[0].mxu0 %v197
  %v353 = vpop.f32.mrb[0].mxu0
  %v354 = vadd.f32 %v136, %v353
  %v355 = vpop.f32.mrb[0].mxu0
  %v356 = vpop.f32.mrb[0].mxu0
  %v357 = vadd.f32 %v136, %v356
  %v358 = vpop.f32.mrb[0].mxu0
  %359 = vdwg.mxu0
  %vm360 = vcmask 130048
  %361 = vst.msk [vmem:[%s3] sm:$0xff] %vm360, %v234
  %362 = vst.msk [vmem:[%s3 + $0x8] sm:$0xff] %vm360, %v237
  %363 = vst.msk [vmem:[%s3 + $0x10] sm:$0xff] %vm360, %v242
  %364 = vst.msk [vmem:[%s3 + $0x18] sm:$0xff] %vm360, %v245
  %365 = vst.msk [vmem:[%s3 + $0x20] sm:$0xff] %vm360, %v250
  %366 = vst.msk [vmem:[%s3 + $0x28] sm:$0xff] %vm360, %v253
  %367 = vst.msk [vmem:[%s3 + $0x30] sm:$0xff] %vm360, %v258
  %368 = vst.msk [vmem:[%s3 + $0x38] sm:$0xff] %vm360, %v261
  %369 = vst.msk [vmem:[%s3 + $0x40] sm:$0xff] %vm360, %v266
  %370 = vst.msk [vmem:[%s3 + $0x48] sm:$0xff] %vm360, %v269
  %371 = vst.msk [vmem:[%s3 + $0x50] sm:$0xff] %vm360, %v274
  %372 = vst.msk [vmem:[%s3 + $0x58] sm:$0xff] %vm360, %v277
  %373 = vst.msk [vmem:[%s3 + $0x60] sm:$0xff] %vm360, %v282
  %374 = vst.msk [vmem:[%s3 + $0x68] sm:$0xff] %vm360, %v285
  %375 = vst.msk [vmem:[%s3 + $0x70] sm:$0xff] %vm360, %v290
  %376 = vst.msk [vmem:[%s3 + $0x78] sm:$0xff] %vm360, %v293
  %377 = vst.msk [vmem:[%s3 + $0x80] sm:$0xff] %vm360, %v298
  %378 = vst.msk [vmem:[%s3 + $0x88] sm:$0xff] %vm360, %v301
  %379 = vst.msk [vmem:[%s3 + $0x90] sm:$0xff] %vm360, %v306
  %380 = vst.msk [vmem:[%s3 + $0x98] sm:$0xff] %vm360, %v309
  %381 = vst.msk [vmem:[%s3 + $0xa0] sm:$0xff] %vm360, %v314
  %382 = vst.msk [vmem:[%s3 + $0xa8] sm:$0xff] %vm360, %v317
  %383 = vst.msk [vmem:[%s3 + $0xb0] sm:$0xff] %vm360, %v322
  %384 = vst.msk [vmem:[%s3 + $0xb8] sm:$0xff] %vm360, %v325
  %385 = vst.msk [vmem:[%s3 + $0xc0] sm:$0xff] %vm360, %v330
  %386 = vst.msk [vmem:[%s3 + $0xc8] sm:$0xff] %vm360, %v333
  %387 = vst.msk [vmem:[%s3 + $0xd0] sm:$0xff] %vm360, %v338
  %388 = vst.msk [vmem:[%s3 + $0xd8] sm:$0xff] %vm360, %v341
  %389 = vst.msk [vmem:[%s3 + $0xe0] sm:$0xff] %vm360, %v346
  %390 = vst.msk [vmem:[%s3 + $0xe8] sm:$0xff] %vm360, %v349
  %391 = vst.msk [vmem:[%s3 + $0xf0] sm:$0xff] %vm360, %v354
  %392 = vst.msk [vmem:[%s3 + $0xf8] sm:$0xff] %vm360, %v357
  // Predicated region
  $region14: #{tpu_custom_call.1} parent=0 // pred_check
    _
  $region15: #{tpu_custom_call.1} parent=0 // pred_check_branch
    %394 = sbr.rel (0) target = $region17
  $region16: #{tpu_custom_call.1} parent=0 // pred_region
    _
  $region17: #{tpu_custom_call.1} parent=0 // pred_fallthru
    _
  // Predicated region
  $region18: #{tpu_custom_call.1} parent=0 // pred_check
    _
  $region19: #{tpu_custom_call.1} parent=0 // pred_check_branch
    %396 = sbr.rel (0) target = $region21
  $region20: #{tpu_custom_call.1} parent=0 // pred_region
    _
  $region21: #{tpu_custom_call.1} parent=0 // pred_fallthru
    _

</llo_original>
